<compile_context>
chip_gen: v7x
topology: tpu7x:2x2x1
jax: 0.10.0
libtpu: 0.0.40
codegen_flags: <defaults>
</compile_context>

<pallas_src>
import numpy as np
import jax
import jax.numpy as jnp
from jax.experimental import pallas as pl
from jax.experimental.pallas import tpu as pltpu

NUM_BLOCKS = 4
BN_EPS = 1e-5
ZS_EPS = 1e-5
LANE = 128
SUBLANE = 8
MAX_TILE_B = 2048
VMEM_TILE_BUDGET = 24 * 1024 * 1024   # headroom under the 32 MiB scoped limit
_STEP_OVERHEAD_ROWS = 256             # ~0.35 us grid-step overhead in "rows" of compute


# ----------------------------- Pallas kernel --------------------------------
def ember_fcn_kernel(x_ref, w0_ref, b0_ref, wb_ref, bb_ref, wo_ref, bo_ref,
                     out_ref):
    # Input projection.  ZScale (center/scale + column drop) is pre-folded into
    # w0/b0 by the wrapper, so this single bf16 MXU matmul does all of it.
    x_bf = x_ref[...].astype(jnp.bfloat16)
    h = jnp.dot(x_bf, w0_ref[...],
                preferred_element_type=jnp.float32) + b0_ref[...]

    # 4 TabularBasicBlocks with inference-mode BatchNorm pre-folded into the
    # linear:  h = h + GELU(h @ wb'[i] + bb'[i])
    for i in range(NUM_BLOCKS):
        y = jnp.dot(h.astype(jnp.bfloat16), wb_ref[i],
                    preferred_element_type=jnp.float32) + bb_ref[i]
        # tanh GELU -> EUP slot (idle otherwise); elementwise math stays f32.
        h = h + jax.nn.gelu(y, approximate=True)

    # Final linear to one logit/row: f32 VPU multiply + cross-lane (XLU) reduce
    # instead of a heavily-masked N=1 MXU matmul.
    # TODO(synk): lane-dense (1, tile_b) output slab deprioritized (modest win).
    out_ref[...] = jnp.sum(h * wo_ref[...], axis=-1, keepdims=True) + bo_ref[...]


def _const_spec(shape):
    nd = len(shape)
    return pl.BlockSpec(shape, lambda i, _nd=nd: (0,) * _nd)


def _round_up(v, m):
    return ((v + m - 1) // m) * m


def _choose_tile_b(B, F_pad, D_pad):
    """Pick a batch tile balancing padding waste, grid-step overhead, and VMEM."""
    # Double-buffered x tile + ~6 live [tile_b, D_pad] f32 intermediates.
    per_row_bytes = 2 * F_pad * 4 + 6 * D_pad * 4
    vmem_cap = max(SUBLANE, (VMEM_TILE_BUDGET // per_row_bytes // SUBLANE) * SUBLANE)
    max_tile = min(MAX_TILE_B, vmem_cap)

    B8 = _round_up(B, SUBLANE)
    if B8 <= max_tile:
        return B8, B8                         # single tile, no batch-padding waste

    best = None
    for t in (2048, 1024, 512, 256, 128, 64, 32, 16, 8):
        if t > max_tile:
            continue
        total = _round_up(B8, t)
        cost = total + _STEP_OVERHEAD_ROWS * (total // t)
        if best is None or cost < best[0]:
            best = (cost, t, total)
    return best[1], best[2]


# -------------------- one-time parameter fold / pack -------------------------
def prepare_ember_params(params, n_features):
    """Fold ZScale + BatchNorm into the linears, pad to lane-dense shapes,
    cast matmul weights to bf16.  Run once at model load (not per call)."""
    D = params["w0"].shape[1]
    D_pad = _round_up(max(D, LANE), LANE)
    F_pad = _round_up(max(n_features, LANE), LANE)
    pad_d = D_pad - D

    # ---- fold ZScaleData into the input projection -------------------------
    scale_np = np.asarray(params["scale"])
    keep_idx = np.nonzero(scale_np > ZS_EPS)[0]          # static column selection
    keep_idx_j = jnp.asarray(keep_idx)

    inv_scale = 1.0 / jnp.take(params["scale"], keep_idx_j)            # [n_keep]
    center_k = jnp.take(params["center"], keep_idx_j)                  # [n_keep]

    w0_scaled = params["w0"] * inv_scale[:, None]                      # [n_keep, D]
    b0_fold = params["b0"] - (center_k * inv_scale)[None, :] @ params["w0"]  # [1, D]
    # Dropped / padded features become zero rows -> no gather on x, lane-dense K.
    w0_full = jnp.zeros((F_pad, D), jnp.float32).at[keep_idx_j].set(w0_scaled)

    # ---- fold inference-mode BatchNorm into each block's linear -------------
    inv_std = jax.lax.rsqrt(params["var"] + BN_EPS)                    # [NB,1,D]
    a = params["g"] * inv_std                                          # [NB,1,D]
    wb_fold = params["wb"] * a                                         # scale output cols
    bb_fold = (params["bb"] - params["mu"]) * a + params["be"]         # [NB,1,D]

    # ---- pad d_model to a lane-dense 128, cast MXU weights to bf16 ----------
    w0_p = jnp.pad(w0_full, ((0, 0), (0, pad_d))).astype(jnp.bfloat16)
    b0_p = jnp.pad(b0_fold, ((0, 0), (0, pad_d)))
    wb_p = jnp.pad(wb_fold, ((0, 0), (0, pad_d), (0, pad_d))).astype(jnp.bfloat16)
    bb_p = jnp.pad(bb_fold, ((0, 0), (0, 0), (0, pad_d)))
    wo_p = jnp.pad(params["wo"].reshape(1, D), ((0, 0), (0, pad_d)))   # f32 [1, D_pad]
    bo = params["bo"].reshape(1, 1)                                    # f32 [1, 1]

    return dict(w0=w0_p, b0=b0_p, wb=wb_p, bb=bb_p, wo=wo_p, bo=bo)


# --------------------------------- wrapper ----------------------------------
def _ember_fcn_forward_impl(x, prepared):
    """Full EmberFcn forward (logits, squeezed) via one batch-tiled pallas_call."""
    B, n_features = x.shape
    F_pad = prepared["w0"].shape[0]
    D_pad = prepared["w0"].shape[1]

    tile_b, B_pad = _choose_tile_b(B, F_pad, D_pad)
    pad_b = B_pad - B
    pad_f = F_pad - n_features
    if pad_b or pad_f:
        x = jnp.pad(x, ((0, pad_b), (0, pad_f)))
    n_tiles = B_pad // tile_b

    w0_p, b0_p = prepared["w0"], prepared["b0"]
    wb_p, bb_p = prepared["wb"], prepared["bb"]
    wo_p, bo = prepared["wo"], prepared["bo"]

    in_specs = [
        pl.BlockSpec((tile_b, F_pad), lambda i: (i, 0)),  # batch-tiled input
        _const_spec(w0_p.shape),                          # weights stay VMEM-resident
        _const_spec(b0_p.shape),
        _const_spec(wb_p.shape),
        _const_spec(bb_p.shape),
        _const_spec(wo_p.shape),
        _const_spec(bo.shape),
    ]

    out = pl.pallas_call(
        ember_fcn_kernel,
        out_shape=jax.ShapeDtypeStruct((B_pad, 1), jnp.float32),
        grid=(n_tiles,),
        in_specs=in_specs,
        out_specs=pl.BlockSpec((tile_b, 1), lambda i: (i, 0)),
        compiler_params=pltpu.CompilerParams(
            # On v7x, pltpu.CORE_PARALLEL for this axis can split tiles across
            # the two TensorCores; "parallel" is the portable safe default.
            dimension_semantics=("parallel",),
            vmem_limit_bytes=32 * 1024 * 1024,
        ),
    )(x, w0_p, b0_p, wb_p, bb_p, wo_p, bo)

    return jnp.squeeze(out[:B])   # matches torch .squeeze()


ember_fcn_forward = jax.jit(_ember_fcn_forward_impl)


# ------------------------- deterministic parameters --------------------------
def init_params(key, n_features, d_model):
    ks = jax.random.split(key, 12)

    center = jax.random.normal(ks[0], (n_features,), jnp.float32) * 0.5
    scale_vals = jax.random.uniform(ks[1], (n_features,), jnp.float32,
                                    minval=0.5, maxval=2.0)
    # every 4th feature gets scale 0.0 so ZScaleData drops it
    drop = (jnp.arange(n_features) % 4) == 3
    scale = jnp.where(drop, 0.0, scale_vals)
    n_keep = int(np.count_nonzero(np.asarray(scale) > ZS_EPS))

    w0 = jax.random.normal(ks[2], (n_keep, d_model), jnp.float32) / np.sqrt(n_keep)
    b0 = jnp.zeros((1, d_model), jnp.float32)                     # zero_bias_init

    wb = jax.random.normal(ks[3], (NUM_BLOCKS, d_model, d_model),
                           jnp.float32) / np.sqrt(d_model)
    bb = jax.random.normal(ks[4], (NUM_BLOCKS, 1, d_model), jnp.float32) * 0.05
    g = jax.random.uniform(ks[5], (NUM_BLOCKS, 1, d_model), jnp.float32, 0.8, 1.2)
    be = jax.random.normal(ks[6], (NUM_BLOCKS, 1, d_model), jnp.float32) * 0.1
    mu = jax.random.normal(ks[7], (NUM_BLOCKS, 1, d_model), jnp.float32) * 0.1
    var = jax.random.uniform(ks[8], (NUM_BLOCKS, 1, d_model), jnp.float32, 0.5, 1.5)

    wo = jax.random.normal(ks[9], (d_model, 1), jnp.float32) * 0.1
    bo = jnp.zeros((1, 1), jnp.float32)                           # zero_bias_init

    return dict(center=center, scale=scale, w0=w0, b0=b0, wb=wb, bb=bb,
                g=g, be=be, mu=mu, var=var, wo=wo, bo=bo)


# ------------------------------ pure-JAX reference ---------------------------
def ref_forward(x, p):
    """Faithful un-folded f32 reference (exact erf GELU, as torch nn.GELU)."""
    scale_np = np.asarray(p["scale"])
    idx = jnp.asarray(np.nonzero(scale_np > ZS_EPS)[0])
    xs = (x[:, idx] - p["center"][idx]) / p["scale"][idx]
    h = xs @ p["w0"] + p["b0"]
    for i in range(NUM_BLOCKS):
        y = h @ p["wb"][i] + p["bb"][i]
        y = (y - p["mu"][i]) * jax.lax.rsqrt(p["var"][i] + BN_EPS) * p["g"][i] + p["be"][i]
        y = jax.nn.gelu(y, approximate=False)
        h = h + y
    return jnp.squeeze(h @ p["wo"] + p["bo"])


# ----------------------------------- main -----------------------------------
if __name__ == "__main__":
    key = jax.random.PRNGKey(0)
    k_param, k_x = jax.random.split(key)

    B, N_FEATURES, D_MODEL = 8, 64, 32
    params = init_params(k_param, N_FEATURES, D_MODEL)
    x = jax.random.normal(k_x, (B, N_FEATURES), jnp.float32)

    prepared = prepare_ember_params(params, N_FEATURES)   # one-time fold/pack
    logits = jax.block_until_ready(ember_fcn_forward(x, prepared))

    ref = jax.block_until_ready(ref_forward(x, params))
    assert logits.shape == (B,), logits.shape
    # Relaxed vs. 1e-4: bf16 MXU weights + tanh GELU change rounding vs. the
    # exact-erf f32 reference (expected ~1e-3..1e-2 level deviations).
    np.testing.assert_allclose(np.asarray(logits), np.asarray(ref),
                               rtol=3e-2, atol=3e-2)
    print("KERNEL_OK")
</pallas_src>

<mosaic_0001>
module attributes {stable_mosaic.version = 11 : i64} {
  func.func @ember_fcn_kernel(%arg0: i32, %arg1: memref<8x128xf32, #tpu.memory_space<vmem>>, %arg2: memref<128x128xbf16, #tpu.memory_space<vmem>>, %arg3: memref<1x128xf32, #tpu.memory_space<vmem>>, %arg4: memref<4x128x128xbf16, #tpu.memory_space<vmem>>, %arg5: memref<4x1x128xf32, #tpu.memory_space<vmem>>, %arg6: memref<1x128xf32, #tpu.memory_space<vmem>>, %arg7: memref<1x1xf32, #tpu.memory_space<vmem>>, %arg8: memref<8x1xf32, #tpu.memory_space<vmem>>) attributes {dimension_semantics = [#tpu.dimension_semantics<parallel>], iteration_bounds = array<i64: 1>, scalar_prefetch = 0 : i64, scratch_operands = 0 : i64, tpu.core_type = #tpu.core_type<tc>, window_params = [{transform_indices = @transform_0, window_bounds = array<i64: 8, 128>}, {pipeline_mode = #tpu.pipeline_mode<synchronous>, transform_indices = @transform_1, window_bounds = array<i64: 128, 128>}, {pipeline_mode = #tpu.pipeline_mode<synchronous>, transform_indices = @transform_2, window_bounds = array<i64: 1, 128>}, {pipeline_mode = #tpu.pipeline_mode<synchronous>, transform_indices = @transform_3, window_bounds = array<i64: 4, 128, 128>}, {pipeline_mode = #tpu.pipeline_mode<synchronous>, transform_indices = @transform_4, window_bounds = array<i64: 4, 1, 128>}, {pipeline_mode = #tpu.pipeline_mode<synchronous>, transform_indices = @transform_5, window_bounds = array<i64: 1, 128>}, {pipeline_mode = #tpu.pipeline_mode<synchronous>, transform_indices = @transform_6, window_bounds = array<i64: 1, 1>}, {transform_indices = @transform_7, window_bounds = array<i64: 8, 1>}]} {
    %c0 = arith.constant 0 : index
    %c0_0 = arith.constant 0 : index
    %0 = vector.load %arg1[%c0, %c0_0] : memref<8x128xf32, #tpu.memory_space<vmem>>, vector<8x128xf32>
    %1 = arith.truncf %0 : vector<8x128xf32> to vector<8x128xbf16>
    %c0_1 = arith.constant 0 : index
    %c0_2 = arith.constant 0 : index
    %2 = vector.load %arg2[%c0_1, %c0_2] : memref<128x128xbf16, #tpu.memory_space<vmem>>, vector<128x128xbf16>
    %cst = arith.constant dense<0.000000e+00> : vector<8x128xf32>
    %3 = tpu.matmul %1, %2, %cst {dimension_numbers = #tpu.dot_dimension_numbers<[1], [0], [0], [1], [0, 0, 1, 1], [], []>} : vector<8x128xbf16>, vector<128x128xbf16>, vector<8x128xf32> -> vector<8x128xf32>
    %c0_3 = arith.constant 0 : index
    %c0_4 = arith.constant 0 : index
    %4 = vector.load %arg3[%c0_3, %c0_4] : memref<1x128xf32, #tpu.memory_space<vmem>>, vector<1x128xf32>
    %5 = vector.broadcast %4 : vector<1x128xf32> to vector<8x128xf32>
    %6 = arith.addf %3, %5 : vector<8x128xf32>
    %7 = arith.truncf %6 : vector<8x128xf32> to vector<8x128xbf16>
    %c0_5 = arith.constant 0 : index
    %c0_6 = arith.constant 0 : index
    %c0_7 = arith.constant 0 : index
    %8 = vector.load %arg4[%c0_5, %c0_6, %c0_7] : memref<4x128x128xbf16, #tpu.memory_space<vmem>>, vector<1x128x128xbf16>
    %9 = vector.shape_cast %8 : vector<1x128x128xbf16> to vector<128x128xbf16>
    %cst_8 = arith.constant dense<0.000000e+00> : vector<8x128xf32>
    %10 = tpu.matmul %7, %9, %cst_8 {dimension_numbers = #tpu.dot_dimension_numbers<[1], [0], [0], [1], [0, 0, 1, 1], [], []>} : vector<8x128xbf16>, vector<128x128xbf16>, vector<8x128xf32> -> vector<8x128xf32>
    %c0_9 = arith.constant 0 : index
    %c0_10 = arith.constant 0 : index
    %c0_11 = arith.constant 0 : index
    %11 = vector.load %arg5[%c0_9, %c0_10, %c0_11] : memref<4x1x128xf32, #tpu.memory_space<vmem>>, vector<1x1x128xf32>
    %12 = vector.shape_cast %11 : vector<1x1x128xf32> to vector<1x128xf32>
    %13 = vector.broadcast %12 : vector<1x128xf32> to vector<8x128xf32>
    %14 = arith.addf %10, %13 : vector<8x128xf32>
    %15 = arith.mulf %14, %14 : vector<8x128xf32>
    %16 = arith.mulf %14, %15 : vector<8x128xf32>
    %cst_12 = arith.constant 4.471500e-02 : f32
    %17 = vector.broadcast %cst_12 : f32 to vector<8x128xf32>
    %18 = arith.mulf %17, %16 : vector<8x128xf32>
    %19 = arith.addf %14, %18 : vector<8x128xf32>
    %cst_13 = arith.constant 0.797884583 : f32
    %20 = vector.broadcast %cst_13 : f32 to vector<8x128xf32>
    %21 = arith.mulf %20, %19 : vector<8x128xf32>
    %22 = math.tanh %21 : vector<8x128xf32>
    %cst_14 = arith.constant 1.000000e+00 : f32
    %23 = vector.broadcast %cst_14 : f32 to vector<8x128xf32>
    %24 = arith.addf %23, %22 : vector<8x128xf32>
    %cst_15 = arith.constant 5.000000e-01 : f32
    %25 = vector.broadcast %cst_15 : f32 to vector<8x128xf32>
    %26 = arith.mulf %25, %24 : vector<8x128xf32>
    %27 = arith.mulf %14, %26 : vector<8x128xf32>
    %28 = arith.addf %6, %27 : vector<8x128xf32>
    %29 = arith.truncf %28 : vector<8x128xf32> to vector<8x128xbf16>
    %c1 = arith.constant 1 : index
    %c0_16 = arith.constant 0 : index
    %c0_17 = arith.constant 0 : index
    %30 = vector.load %arg4[%c1, %c0_16, %c0_17] : memref<4x128x128xbf16, #tpu.memory_space<vmem>>, vector<1x128x128xbf16>
    %31 = vector.shape_cast %30 : vector<1x128x128xbf16> to vector<128x128xbf16>
    %cst_18 = arith.constant dense<0.000000e+00> : vector<8x128xf32>
    %32 = tpu.matmul %29, %31, %cst_18 {dimension_numbers = #tpu.dot_dimension_numbers<[1], [0], [0], [1], [0, 0, 1, 1], [], []>} : vector<8x128xbf16>, vector<128x128xbf16>, vector<8x128xf32> -> vector<8x128xf32>
    %c1_19 = arith.constant 1 : index
    %c0_20 = arith.constant 0 : index
    %c0_21 = arith.constant 0 : index
    %33 = vector.load %arg5[%c1_19, %c0_20, %c0_21] : memref<4x1x128xf32, #tpu.memory_space<vmem>>, vector<1x1x128xf32>
    %34 = vector.shape_cast %33 : vector<1x1x128xf32> to vector<1x128xf32>
    %35 = vector.broadcast %34 : vector<1x128xf32> to vector<8x128xf32>
    %36 = arith.addf %32, %35 : vector<8x128xf32>
    %37 = arith.mulf %36, %36 : vector<8x128xf32>
    %38 = arith.mulf %36, %37 : vector<8x128xf32>
    %cst_22 = arith.constant 4.471500e-02 : f32
    %39 = vector.broadcast %cst_22 : f32 to vector<8x128xf32>
    %40 = arith.mulf %39, %38 : vector<8x128xf32>
    %41 = arith.addf %36, %40 : vector<8x128xf32>
    %cst_23 = arith.constant 0.797884583 : f32
    %42 = vector.broadcast %cst_23 : f32 to vector<8x128xf32>
    %43 = arith.mulf %42, %41 : vector<8x128xf32>
    %44 = math.tanh %43 : vector<8x128xf32>
    %cst_24 = arith.constant 1.000000e+00 : f32
    %45 = vector.broadcast %cst_24 : f32 to vector<8x128xf32>
    %46 = arith.addf %45, %44 : vector<8x128xf32>
    %cst_25 = arith.constant 5.000000e-01 : f32
    %47 = vector.broadcast %cst_25 : f32 to vector<8x128xf32>
    %48 = arith.mulf %47, %46 : vector<8x128xf32>
    %49 = arith.mulf %36, %48 : vector<8x128xf32>
    %50 = arith.addf %28, %49 : vector<8x128xf32>
    %51 = arith.truncf %50 : vector<8x128xf32> to vector<8x128xbf16>
    %c2 = arith.constant 2 : index
    %c0_26 = arith.constant 0 : index
    %c0_27 = arith.constant 0 : index
    %52 = vector.load %arg4[%c2, %c0_26, %c0_27] : memref<4x128x128xbf16, #tpu.memory_space<vmem>>, vector<1x128x128xbf16>
    %53 = vector.shape_cast %52 : vector<1x128x128xbf16> to vector<128x128xbf16>
    %cst_28 = arith.constant dense<0.000000e+00> : vector<8x128xf32>
    %54 = tpu.matmul %51, %53, %cst_28 {dimension_numbers = #tpu.dot_dimension_numbers<[1], [0], [0], [1], [0, 0, 1, 1], [], []>} : vector<8x128xbf16>, vector<128x128xbf16>, vector<8x128xf32> -> vector<8x128xf32>
    %c2_29 = arith.constant 2 : index
    %c0_30 = arith.constant 0 : index
    %c0_31 = arith.constant 0 : index
    %55 = vector.load %arg5[%c2_29, %c0_30, %c0_31] : memref<4x1x128xf32, #tpu.memory_space<vmem>>, vector<1x1x128xf32>
    %56 = vector.shape_cast %55 : vector<1x1x128xf32> to vector<1x128xf32>
    %57 = vector.broadcast %56 : vector<1x128xf32> to vector<8x128xf32>
    %58 = arith.addf %54, %57 : vector<8x128xf32>
    %59 = arith.mulf %58, %58 : vector<8x128xf32>
    %60 = arith.mulf %58, %59 : vector<8x128xf32>
    %cst_32 = arith.constant 4.471500e-02 : f32
    %61 = vector.broadcast %cst_32 : f32 to vector<8x128xf32>
    %62 = arith.mulf %61, %60 : vector<8x128xf32>
    %63 = arith.addf %58, %62 : vector<8x128xf32>
    %cst_33 = arith.constant 0.797884583 : f32
    %64 = vector.broadcast %cst_33 : f32 to vector<8x128xf32>
    %65 = arith.mulf %64, %63 : vector<8x128xf32>
    %66 = math.tanh %65 : vector<8x128xf32>
    %cst_34 = arith.constant 1.000000e+00 : f32
    %67 = vector.broadcast %cst_34 : f32 to vector<8x128xf32>
    %68 = arith.addf %67, %66 : vector<8x128xf32>
    %cst_35 = arith.constant 5.000000e-01 : f32
    %69 = vector.broadcast %cst_35 : f32 to vector<8x128xf32>
    %70 = arith.mulf %69, %68 : vector<8x128xf32>
    %71 = arith.mulf %58, %70 : vector<8x128xf32>
    %72 = arith.addf %50, %71 : vector<8x128xf32>
    %73 = arith.truncf %72 : vector<8x128xf32> to vector<8x128xbf16>
    %c3 = arith.constant 3 : index
    %c0_36 = arith.constant 0 : index
    %c0_37 = arith.constant 0 : index
    %74 = vector.load %arg4[%c3, %c0_36, %c0_37] : memref<4x128x128xbf16, #tpu.memory_space<vmem>>, vector<1x128x128xbf16>
    %75 = vector.shape_cast %74 : vector<1x128x128xbf16> to vector<128x128xbf16>
    %cst_38 = arith.constant dense<0.000000e+00> : vector<8x128xf32>
    %76 = tpu.matmul %73, %75, %cst_38 {dimension_numbers = #tpu.dot_dimension_numbers<[1], [0], [0], [1], [0, 0, 1, 1], [], []>} : vector<8x128xbf16>, vector<128x128xbf16>, vector<8x128xf32> -> vector<8x128xf32>
    %c3_39 = arith.constant 3 : index
    %c0_40 = arith.constant 0 : index
    %c0_41 = arith.constant 0 : index
    %77 = vector.load %arg5[%c3_39, %c0_40, %c0_41] : memref<4x1x128xf32, #tpu.memory_space<vmem>>, vector<1x1x128xf32>
    %78 = vector.shape_cast %77 : vector<1x1x128xf32> to vector<1x128xf32>
    %79 = vector.broadcast %78 : vector<1x128xf32> to vector<8x128xf32>
    %80 = arith.addf %76, %79 : vector<8x128xf32>
    %81 = arith.mulf %80, %80 : vector<8x128xf32>
    %82 = arith.mulf %80, %81 : vector<8x128xf32>
    %cst_42 = arith.constant 4.471500e-02 : f32
    %83 = vector.broadcast %cst_42 : f32 to vector<8x128xf32>
    %84 = arith.mulf %83, %82 : vector<8x128xf32>
    %85 = arith.addf %80, %84 : vector<8x128xf32>
    %cst_43 = arith.constant 0.797884583 : f32
    %86 = vector.broadcast %cst_43 : f32 to vector<8x128xf32>
    %87 = arith.mulf %86, %85 : vector<8x128xf32>
    %88 = math.tanh %87 : vector<8x128xf32>
    %cst_44 = arith.constant 1.000000e+00 : f32
    %89 = vector.broadcast %cst_44 : f32 to vector<8x128xf32>
    %90 = arith.addf %89, %88 : vector<8x128xf32>
    %cst_45 = arith.constant 5.000000e-01 : f32
    %91 = vector.broadcast %cst_45 : f32 to vector<8x128xf32>
    %92 = arith.mulf %91, %90 : vector<8x128xf32>
    %93 = arith.mulf %80, %92 : vector<8x128xf32>
    %94 = arith.addf %72, %93 : vector<8x128xf32>
    %c0_46 = arith.constant 0 : index
    %c0_47 = arith.constant 0 : index
    %95 = vector.load %arg6[%c0_46, %c0_47] : memref<1x128xf32, #tpu.memory_space<vmem>>, vector<1x128xf32>
    %96 = vector.broadcast %95 : vector<1x128xf32> to vector<8x128xf32>
    %97 = arith.mulf %94, %96 : vector<8x128xf32>
    %cst_48 = arith.constant dense<0.000000e+00> : vector<8xf32>
    %98 = vector.multi_reduction <add>, %97, %cst_48 [1] : vector<8x128xf32> to vector<8xf32>
    %99 = vector.shape_cast %98 : vector<8xf32> to vector<8x1xf32>
    %c0_49 = arith.constant 0 : index
    %c0_50 = arith.constant 0 : index
    %100 = vector.load %arg7[%c0_49, %c0_50] : memref<1x1xf32, #tpu.memory_space<vmem>>, vector<1x1xf32>
    %101 = vector.broadcast %100 : vector<1x1xf32> to vector<8x1xf32>
    %102 = arith.addf %99, %101 : vector<8x1xf32>
    %c0_51 = arith.constant 0 : index
    %c0_52 = arith.constant 0 : index
    %103 = vector.load %arg8[%c0_51, %c0_52] : memref<8x1xf32, #tpu.memory_space<vmem>>, vector<8x1xf32>
    tpu.vector_store %arg8[%c0_51, %c0_52], %102 {strides = array<i32>} : memref<8x1xf32, #tpu.memory_space<vmem>>, vector<8x1xf32>,
    return
  }
  func.func @transform_0(%arg0: i32) -> (i32, i32) {
    %c0_i32 = arith.constant 0 : i32
    %c0_i32_0 = arith.constant 0 : i32
    return %arg0, %c0_i32 : i32, i32
  }
  func.func @transform_1(%arg0: i32) -> (i32, i32) {
    %c0_i32 = arith.constant 0 : i32
    %c0_i32_0 = arith.constant 0 : i32
    %c0_i32_1 = arith.constant 0 : i32
    return %c0_i32, %c0_i32_0 : i32, i32
  }
  func.func @transform_2(%arg0: i32) -> (i32, i32) {
    %c0_i32 = arith.constant 0 : i32
    %c0_i32_0 = arith.constant 0 : i32
    %c0_i32_1 = arith.constant 0 : i32
    return %c0_i32, %c0_i32_0 : i32, i32
  }
  func.func @transform_3(%arg0: i32) -> (i32, i32, i32) {
    %c0_i32 = arith.constant 0 : i32
    %c0_i32_0 = arith.constant 0 : i32
    %c0_i32_1 = arith.constant 0 : i32
    %c0_i32_2 = arith.constant 0 : i32
    return %c0_i32, %c0_i32_0, %c0_i32_1 : i32, i32, i32
  }
  func.func @transform_4(%arg0: i32) -> (i32, i32, i32) {
    %c0_i32 = arith.constant 0 : i32
    %c0_i32_0 = arith.constant 0 : i32
    %c0_i32_1 = arith.constant 0 : i32
    %c0_i32_2 = arith.constant 0 : i32
    return %c0_i32, %c0_i32_0, %c0_i32_1 : i32, i32, i32
  }
  func.func @transform_5(%arg0: i32) -> (i32, i32) {
    %c0_i32 = arith.constant 0 : i32
    %c0_i32_0 = arith.constant 0 : i32
    %c0_i32_1 = arith.constant 0 : i32
    return %c0_i32, %c0_i32_0 : i32, i32
  }
  func.func @transform_6(%arg0: i32) -> (i32, i32) {
    %c0_i32 = arith.constant 0 : i32
    %c0_i32_0 = arith.constant 0 : i32
    %c0_i32_1 = arith.constant 0 : i32
    return %c0_i32, %c0_i32_0 : i32, i32
  }
  func.func @transform_7(%arg0: i32) -> (i32, i32) {
    %c0_i32 = arith.constant 0 : i32
    %c0_i32_0 = arith.constant 0 : i32
    return %arg0, %c0_i32 : i32, i32
  }
}

</mosaic_0001>

<llo_original>
// kernel: _ember_fcn_forward_impl.1
$region0: #{_ember_fcn_forward_impl.1}
  #allocation0 [shape = 'u32[]', space=smem, size = 0x4, offset = 0x4, fixed_abs, tag = 'smem constant byte address 0x4 - core index']
  #allocation1 [shape = 'u32[144,128]{1,0:T(1,128)}', space=vmem, size = 0x12000, scoped, tag = 'internal scratch']
  #allocation2 [shape = 'f32[1,1]{1,0:T(1,128)S(1)}', space=vmem, size = 0x200, scoped, tag = 'scoped memory for _ember_fcn_forward_impl.1']
  %s0 = inlined_call_operand.vmem [shape: f32[8,128], index: 0, kind: input, shape index: {}]
  %s1 = inlined_call_operand.hbm [shape: bf16[128,128], index: 1, kind: input, shape index: {}]
  %s2 = inlined_call_operand.vmem [shape: f32[1,128], index: 2, kind: input, shape index: {}]
  %s3 = inlined_call_operand.hbm [shape: bf16[4,128,128], index: 3, kind: input, shape index: {}]
  %s4 = inlined_call_operand.vmem [shape: f32[4,1,128], index: 4, kind: input, shape index: {}]
  %s5 = inlined_call_operand.vmem [shape: f32[1,128], index: 5, kind: input, shape index: {}]
  %s6 = inlined_call_operand.<no memory space> [shape: f32[1,1], index: 6, kind: input, shape index: {}]
  %s7 = inlined_call_operand.vmem [shape: f32[8,1], index: 7, kind: output, shape index: {}]
  %s8 = sld [smem:[#allocation0]]
  $region46: #{_ember_fcn_forward_impl.1} parent=0
    _
  %s10 = ssub.s32 1, %s8
  %s11 = scalar_select 0, %s10, %s8
  %v12 = vstv %s6
  %13 = vst [vmem:[#allocation2] sm:$0x1] %v12
  $region1: #{_ember_fcn_forward_impl.1} parent=0
    #allocation3 [shape = 'u8[32768]{0}', space=vmem, size = 0x8000, scoped, tag = 'input window, operand 1, single buffered']
    #allocation4 [shape = 's32[1]{0}', space=sflag, size = 0x4, scoped, tag = 'scoped memory for _ember_fcn_forward_impl.1']
    #allocation5 [shape = 'u8[131072]{0}', space=vmem, size = 0x20000, scoped, tag = 'input window, operand 3, single buffered']
    #allocation6 [shape = 's32[1]{0}', space=sflag, size = 0x4, scoped, tag = 'scoped memory for _ember_fcn_forward_impl.1']
    %14 = vsyncpa [#allocation4], 0
    %15 = vsyncpa [#allocation6], 0
    // Predicated region
    $region2: #{_ember_fcn_forward_impl.1} parent=1 // pred_check
      _
    $region3: #{_ember_fcn_forward_impl.1} parent=1 // pred_check_branch
      %17 = sbr.rel (0) target = $region5
    $region4: #{_ember_fcn_forward_impl.1} parent=1 // pred_region
      _
    $region5: #{_ember_fcn_forward_impl.1} parent=1 // pred_fallthru
      _
    // Predicated region
    $region6: #{_ember_fcn_forward_impl.1} parent=1 // pred_check
      _
    $region7: #{_ember_fcn_forward_impl.1} parent=1 // pred_check_branch
      %19 = sbr.rel (0) target = $region9
    $region8: #{_ember_fcn_forward_impl.1} parent=1 // pred_region
      %s21 = ssub.s32 1024, 1024
      %22 = vsyncadd [#allocation4], %s21
      %s23 = sshll.u32 [#allocation3], 4
      %s24 = int_to_ptr.vmem [resolvable:$true] %s23
      %29 = dma.hbm_to_vmem [thread:$0]  %s1, 1024, %s24, [#allocation4], 64, 64, 4
    $region9: #{_ember_fcn_forward_impl.1} parent=1 // pred_fallthru
      _
    // Predicated region
    $region10: #{_ember_fcn_forward_impl.1} parent=1 // pred_check
      _
    $region11: #{_ember_fcn_forward_impl.1} parent=1 // pred_check_branch
      %31 = sbr.rel (0) target = $region13
    $region12: #{_ember_fcn_forward_impl.1} parent=1 // pred_region
      _
    $region13: #{_ember_fcn_forward_impl.1} parent=1 // pred_fallthru
      _
    // Predicated region
    $region14: #{_ember_fcn_forward_impl.1} parent=1 // pred_check
      _
    $region15: #{_ember_fcn_forward_impl.1} parent=1 // pred_check_branch
      %33 = sbr.rel (0) target = $region17
    $region16: #{_ember_fcn_forward_impl.1} parent=1 // pred_region
      %s35 = ssub.s32 4096, 4096
      %36 = vsyncadd [#allocation6], %s35
      %s37 = sshll.u32 [#allocation5], 4
      %s38 = int_to_ptr.vmem [resolvable:$true] %s37
      %43 = dma.hbm_to_vmem [thread:$0]  %s3, 4096, %s38, [#allocation6], 64, 64, 4
    $region17: #{_ember_fcn_forward_impl.1} parent=1 // pred_fallthru
      _
    // Predicated region
    $region18: #{_ember_fcn_forward_impl.1} parent=1 // pred_check
      _
    $region19: #{_ember_fcn_forward_impl.1} parent=1 // pred_check_branch
      %45 = sbr.rel (0) target = $region21
    $region20: #{_ember_fcn_forward_impl.1} parent=1 // pred_region
      _
    $region21: #{_ember_fcn_forward_impl.1} parent=1 // pred_fallthru
      _
    // Predicated region
    $region22: #{_ember_fcn_forward_impl.1} parent=1 // pred_check
      _
    $region23: #{_ember_fcn_forward_impl.1} parent=1 // pred_check_branch
      %47 = sbr.rel (0) target = $region25
    $region24: #{_ember_fcn_forward_impl.1} parent=1 // pred_region
      _
    $region25: #{_ember_fcn_forward_impl.1} parent=1 // pred_fallthru
      _
    // Predicated region
    $region26: #{_ember_fcn_forward_impl.1} parent=1 // pred_check
      _
    $region27: #{_ember_fcn_forward_impl.1} parent=1 // pred_check_branch
      %49 = sbr.rel (0) target = $region29
    $region28: #{_ember_fcn_forward_impl.1} parent=1 // pred_region
      _
    $region29: #{_ember_fcn_forward_impl.1} parent=1 // pred_fallthru
      _
    // Predicated region
    $region30: #{_ember_fcn_forward_impl.1} parent=1 // pred_check
      _
    $region31: #{_ember_fcn_forward_impl.1} parent=1 // pred_check_branch
      %51 = sbr.rel (0) target = $region33
    $region32: #{_ember_fcn_forward_impl.1} parent=1 // pred_region
      %52 = dma.done [#allocation4], 1024
    $region33: #{_ember_fcn_forward_impl.1} parent=1 // pred_fallthru
      _
    // Predicated region
    $region34: #{_ember_fcn_forward_impl.1} parent=1 // pred_check
      _
    $region35: #{_ember_fcn_forward_impl.1} parent=1 // pred_check_branch
      %54 = sbr.rel (0) target = $region37
    $region36: #{_ember_fcn_forward_impl.1} parent=1 // pred_region
      %55 = dma.done [#allocation6], 4096
    $region37: #{_ember_fcn_forward_impl.1} parent=1 // pred_fallthru
      _
    %v57 = vld [vmem:[%s0] sm:$0xff]
    %v58 = vpack.c.bf16 %v57, %v57
    %v59 = vld [vmem:[#allocation3] sm:$0xf]
    %v60 = vld [vmem:[#allocation3 + $0x4] sm:$0xf]
    %v61 = vld [vmem:[#allocation3 + $0x8] sm:$0xf]
    %v62 = vld [vmem:[#allocation3 + $0xc] sm:$0xf]
    %v63 = vld [vmem:[#allocation3 + $0x10] sm:$0xf]
    %v64 = vld [vmem:[#allocation3 + $0x14] sm:$0xf]
    %v65 = vld [vmem:[#allocation3 + $0x18] sm:$0xf]
    %v66 = vld [vmem:[#allocation3 + $0x1c] sm:$0xf]
    %v67 = vld [vmem:[#allocation3 + $0x20] sm:$0xf]
    %v68 = vld [vmem:[#allocation3 + $0x24] sm:$0xf]
    %v69 = vld [vmem:[#allocation3 + $0x28] sm:$0xf]
    %v70 = vld [vmem:[#allocation3 + $0x2c] sm:$0xf]
    %v71 = vld [vmem:[#allocation3 + $0x30] sm:$0xf]
    %v72 = vld [vmem:[#allocation3 + $0x34] sm:$0xf]
    %v73 = vld [vmem:[#allocation3 + $0x38] sm:$0xf]
    %v74 = vld [vmem:[#allocation3 + $0x3c] sm:$0xf]
    %v75 = vld [vmem:[%s2] sm:$0x1]
    %v77 = vlaneseq
    %v78 = vshrl.u32 %v77, 7
    %v79 = vsub.s32 0, %v78
    %v80 = vrot.slane %v75, %v79
    %v98 = vunpack.c.l.b16 %v59
    %v99 = vunpack.c.l.b16 %v60
    %v100 = vunpack.c.l.b16 %v61
    %v101 = vunpack.c.l.b16 %v62
    %v102 = vunpack.c.l.b16 %v63
    %v103 = vunpack.c.l.b16 %v64
    %v104 = vunpack.c.l.b16 %v65
    %v105 = vunpack.c.l.b16 %v66
    %v106 = vunpack.c.l.b16 %v67
    %v107 = vunpack.c.l.b16 %v68
    %v108 = vunpack.c.l.b16 %v69
    %v109 = vunpack.c.l.b16 %v70
    %v110 = vunpack.c.l.b16 %v71
    %v111 = vunpack.c.l.b16 %v72
    %v112 = vunpack.c.l.b16 %v73
    %v113 = vunpack.c.l.b16 %v74
    %v114 = vpack.c.b16 %v99, %v98
    %v115 = vpack.c.b16 %v101, %v100
    %v116 = vpack.c.b16 %v103, %v102
    %v117 = vpack.c.b16 %v105, %v104
    %v118 = vpack.c.b16 %v107, %v106
    %v119 = vpack.c.b16 %v109, %v108
    %v120 = vpack.c.b16 %v111, %v110
    %v121 = vpack.c.b16 %v113, %v112
    %130 = vmatprep.subr.bf16.mxu0 0
    %131 = vmatpush1.bf16.msra.mxu0 %v114
    %132 = vmatprep.subr.bf16.mxu0 0
    %133 = vmatpush1.bf16.msra.mxu0 %v115
    %134 = vmatprep.subr.bf16.mxu0 0
    %135 = vmatpush1.bf16.msra.mxu0 %v116
    %136 = vmatprep.subr.bf16.mxu0 0
    %137 = vmatpush1.bf16.msra.mxu0 %v117
    %138 = vmatprep.subr.bf16.mxu0 0
    %139 = vmatpush1.bf16.msra.mxu0 %v118
    %140 = vmatprep.subr.bf16.mxu0 0
    %141 = vmatpush1.bf16.msra.mxu0 %v119
    %142 = vmatprep.subr.bf16.mxu0 0
    %143 = vmatpush1.bf16.msra.mxu0 %v120
    %144 = vmatprep.subr.bf16.mxu0 0
    %145 = vmatpush1.bf16.msra.mxu0 %v121
    %146 = vmatprep.subr.bf16.mxu0 0
    %147 = vmatpush1.bf16.msra.mxu0 0
    %148 = vmatprep.subr.bf16.mxu0 0
    %149 = vmatpush1.bf16.msra.mxu0 0
    %150 = vmatprep.subr.bf16.mxu0 0
    %151 = vmatpush1.bf16.msra.mxu0 0
    %152 = vmatprep.subr.bf16.mxu0 0
    %153 = vmatpush1.bf16.msra.mxu0 0
    %154 = vmatprep.subr.bf16.mxu0 0
    %155 = vmatpush1.bf16.msra.mxu0 0
    %156 = vmatprep.subr.bf16.mxu0 0
    %157 = vmatpush1.bf16.msra.mxu0 0
    %158 = vmatprep.subr.bf16.mxu0 0
    %159 = vmatpush1.bf16.msra.mxu0 0
    %160 = vmatprep.subr.bf16.mxu0 0
    %161 = vmatpush1.bf16.msra.mxu0 0
    %162 = vmatprep.mubr.bf16.mxu0 0
    %163 = vmatmul.mubr.bf16.gmra.mrb[0].mxu0 %v58
    %v164 = vpop.f32.mrb[0].mxu0
    %v165 = vadd.f32 %v80, %v164
    %v166 = vpop.f32.mrb[0].mxu0
    %v167 = vpop.f32.mrb[0].mxu0
    %v168 = vpop.f32.mrb[0].mxu0
    %169 = vdwg.mxu0
    %v170 = vpack.c.bf16 %v165, %v165
    %v171 = vld [vmem:[#allocation5] sm:$0xf]
    %v172 = vld [vmem:[#allocation5 + $0x4] sm:$0xf]
    %v173 = vld [vmem:[#allocation5 + $0x8] sm:$0xf]
    %v174 = vld [vmem:[#allocation5 + $0xc] sm:$0xf]
    %v175 = vld [vmem:[#allocation5 + $0x10] sm:$0xf]
    %v176 = vld [vmem:[#allocation5 + $0x14] sm:$0xf]
    %v177 = vld [vmem:[#allocation5 + $0x18] sm:$0xf]
    %v178 = vld [vmem:[#allocation5 + $0x1c] sm:$0xf]
    %v179 = vld [vmem:[#allocation5 + $0x20] sm:$0xf]
    %v180 = vld [vmem:[#allocation5 + $0x24] sm:$0xf]
    %v181 = vld [vmem:[#allocation5 + $0x28] sm:$0xf]
    %v182 = vld [vmem:[#allocation5 + $0x2c] sm:$0xf]
    %v183 = vld [vmem:[#allocation5 + $0x30] sm:$0xf]
    %v184 = vld [vmem:[#allocation5 + $0x34] sm:$0xf]
    %v185 = vld [vmem:[#allocation5 + $0x38] sm:$0xf]
    %v186 = vld [vmem:[#allocation5 + $0x3c] sm:$0xf]
    %v187 = vld [vmem:[%s4] sm:$0x1]
    %v189 = vlaneseq
    %v190 = vshrl.u32 %v189, 7
    %v191 = vsub.s32 0, %v190
    %v192 = vrot.slane %v187, %v191
    %v210 = vunpack.c.l.b16 %v171
    %v211 = vunpack.c.l.b16 %v172
    %v212 = vunpack.c.l.b16 %v173
    %v213 = vunpack.c.l.b16 %v174
    %v214 = vunpack.c.l.b16 %v175
    %v215 = vunpack.c.l.b16 %v176
    %v216 = vunpack.c.l.b16 %v177
    %v217 = vunpack.c.l.b16 %v178
    %v218 = vunpack.c.l.b16 %v179
    %v219 = vunpack.c.l.b16 %v180
    %v220 = vunpack.c.l.b16 %v181
    %v221 = vunpack.c.l.b16 %v182
    %v222 = vunpack.c.l.b16 %v183
    %v223 = vunpack.c.l.b16 %v184
    %v224 = vunpack.c.l.b16 %v185
    %v225 = vunpack.c.l.b16 %v186
    %v226 = vpack.c.b16 %v211, %v210
    %v227 = vpack.c.b16 %v213, %v212
    %v228 = vpack.c.b16 %v215, %v214
    %v229 = vpack.c.b16 %v217, %v216
    %v230 = vpack.c.b16 %v219, %v218
    %v231 = vpack.c.b16 %v221, %v220
    %v232 = vpack.c.b16 %v223, %v222
    %v233 = vpack.c.b16 %v225, %v224
    %242 = vmatprep.subr.bf16.mxu0 0
    %243 = vmatpush1.bf16.msra.mxu0 %v226
    %244 = vmatprep.subr.bf16.mxu0 0
    %245 = vmatpush1.bf16.msra.mxu0 %v227
    %246 = vmatprep.subr.bf16.mxu0 0
    %247 = vmatpush1.bf16.msra.mxu0 %v228
    %248 = vmatprep.subr.bf16.mxu0 0
    %249 = vmatpush1.bf16.msra.mxu0 %v229
    %250 = vmatprep.subr.bf16.mxu0 0
    %251 = vmatpush1.bf16.msra.mxu0 %v230
    %252 = vmatprep.subr.bf16.mxu0 0
    %253 = vmatpush1.bf16.msra.mxu0 %v231
    %254 = vmatprep.subr.bf16.mxu0 0
    %255 = vmatpush1.bf16.msra.mxu0 %v232
    %256 = vmatprep.subr.bf16.mxu0 0
    %257 = vmatpush1.bf16.msra.mxu0 %v233
    %258 = vmatprep.subr.bf16.mxu0 0
    %259 = vmatpush1.bf16.msra.mxu0 0
    %260 = vmatprep.subr.bf16.mxu0 0
    %261 = vmatpush1.bf16.msra.mxu0 0
    %262 = vmatprep.subr.bf16.mxu0 0
    %263 = vmatpush1.bf16.msra.mxu0 0
    %264 = vmatprep.subr.bf16.mxu0 0
    %265 = vmatpush1.bf16.msra.mxu0 0
    %266 = vmatprep.subr.bf16.mxu0 0
    %267 = vmatpush1.bf16.msra.mxu0 0
    %268 = vmatprep.subr.bf16.mxu0 0
    %269 = vmatpush1.bf16.msra.mxu0 0
    %270 = vmatprep.subr.bf16.mxu0 0
    %271 = vmatpush1.bf16.msra.mxu0 0
    %272 = vmatprep.subr.bf16.mxu0 0
    %273 = vmatpush1.bf16.msra.mxu0 0
    %274 = vmatprep.mubr.bf16.mxu0 0
    %275 = vmatmul.mubr.bf16.gmra.mrb[0].mxu0 %v170
    %v276 = vpop.f32.mrb[0].mxu0
    %v277 = vadd.f32 %v192, %v276
    %v278 = vpop.f32.mrb[0].mxu0
    %v279 = vpop.f32.mrb[0].mxu0
    %v280 = vpop.f32.mrb[0].mxu0
    %281 = vdwg.mxu0
    %v282 = vmul.f32 %v277, %v277
    %v283 = vmul.f32 %v277, %v282
    %v284 = vmul.f32 %v283, 0.044715
    %v285 = vadd.f32 %v277, %v284
    %v286 = vmul.f32 %v285, 0.7978846
    %v287 = vtanh.pop %v286
    %v288 = vadd.f32 %v287, 1.0
    %v289 = vmul.f32 %v288, 0.5
    %v290 = vmul.f32 %v277, %v289
    %v291 = vadd.f32 %v165, %v290
    %v292 = vpack.c.bf16 %v291, %v291
    %s293 = scalar_lea.vmem [#allocation5], 64
    %v294 = vld [vmem:[%s293] sm:$0xf]
    %v295 = vld [vmem:[%s293 + $0x4] sm:$0xf]
    %v296 = vld [vmem:[%s293 + $0x8] sm:$0xf]
    %v297 = vld [vmem:[%s293 + $0xc] sm:$0xf]
    %v298 = vld [vmem:[%s293 + $0x10] sm:$0xf]
    %v299 = vld [vmem:[%s293 + $0x14] sm:$0xf]
    %v300 = vld [vmem:[%s293 + $0x18] sm:$0xf]
    %v301 = vld [vmem:[%s293 + $0x1c] sm:$0xf]
    %v302 = vld [vmem:[%s293 + $0x20] sm:$0xf]
    %v303 = vld [vmem:[%s293 + $0x24] sm:$0xf]
    %v304 = vld [vmem:[%s293 + $0x28] sm:$0xf]
    %v305 = vld [vmem:[%s293 + $0x2c] sm:$0xf]
    %v306 = vld [vmem:[%s293 + $0x30] sm:$0xf]
    %v307 = vld [vmem:[%s293 + $0x34] sm:$0xf]
    %v308 = vld [vmem:[%s293 + $0x38] sm:$0xf]
    %v309 = vld [vmem:[%s293 + $0x3c] sm:$0xf]
    %s310 = scalar_lea.vmem %s4, 1
    %v311 = vld [vmem:[%s310] sm:$0x1]
    %v313 = vlaneseq
    %v314 = vshrl.u32 %v313, 7
    %v315 = vsub.s32 0, %v314
    %v316 = vrot.slane %v311, %v315
    %v334 = vunpack.c.l.b16 %v294
    %v335 = vunpack.c.l.b16 %v295
    %v336 = vunpack.c.l.b16 %v296
    %v337 = vunpack.c.l.b16 %v297
    %v338 = vunpack.c.l.b16 %v298
    %v339 = vunpack.c.l.b16 %v299
    %v340 = vunpack.c.l.b16 %v300
    %v341 = vunpack.c.l.b16 %v301
    %v342 = vunpack.c.l.b16 %v302
    %v343 = vunpack.c.l.b16 %v303
    %v344 = vunpack.c.l.b16 %v304
    %v345 = vunpack.c.l.b16 %v305
    %v346 = vunpack.c.l.b16 %v306
    %v347 = vunpack.c.l.b16 %v307
    %v348 = vunpack.c.l.b16 %v308
    %v349 = vunpack.c.l.b16 %v309
    %v350 = vpack.c.b16 %v335, %v334
    %v351 = vpack.c.b16 %v337, %v336
    %v352 = vpack.c.b16 %v339, %v338
    %v353 = vpack.c.b16 %v341, %v340
    %v354 = vpack.c.b16 %v343, %v342
    %v355 = vpack.c.b16 %v345, %v344
    %v356 = vpack.c.b16 %v347, %v346
    %v357 = vpack.c.b16 %v349, %v348
    %366 = vmatprep.subr.bf16.mxu0 0
    %367 = vmatpush1.bf16.msra.mxu0 %v350
    %368 = vmatprep.subr.bf16.mxu0 0
    %369 = vmatpush1.bf16.msra.mxu0 %v351
    %370 = vmatprep.subr.bf16.mxu0 0
    %371 = vmatpush1.bf16.msra.mxu0 %v352
    %372 = vmatprep.subr.bf16.mxu0 0
    %373 = vmatpush1.bf16.msra.mxu0 %v353
    %374 = vmatprep.subr.bf16.mxu0 0
    %375 = vmatpush1.bf16.msra.mxu0 %v354
    %376 = vmatprep.subr.bf16.mxu0 0
    %377 = vmatpush1.bf16.msra.mxu0 %v355
    %378 = vmatprep.subr.bf16.mxu0 0
    %379 = vmatpush1.bf16.msra.mxu0 %v356
    %380 = vmatprep.subr.bf16.mxu0 0
    %381 = vmatpush1.bf16.msra.mxu0 %v357
    %382 = vmatprep.subr.bf16.mxu0 0
    %383 = vmatpush1.bf16.msra.mxu0 0
    %384 = vmatprep.subr.bf16.mxu0 0
    %385 = vmatpush1.bf16.msra.mxu0 0
    %386 = vmatprep.subr.bf16.mxu0 0
    %387 = vmatpush1.bf16.msra.mxu0 0
    %388 = vmatprep.subr.bf16.mxu0 0
    %389 = vmatpush1.bf16.msra.mxu0 0
    %390 = vmatprep.subr.bf16.mxu0 0
    %391 = vmatpush1.bf16.msra.mxu0 0
    %392 = vmatprep.subr.bf16.mxu0 0
    %393 = vmatpush1.bf16.msra.mxu0 0
    %394 = vmatprep.subr.bf16.mxu0 0
    %395 = vmatpush1.bf16.msra.mxu0 0
    %396 = vmatprep.subr.bf16.mxu0 0
    %397 = vmatpush1.bf16.msra.mxu0 0
    %398 = vmatprep.mubr.bf16.mxu0 0
    %399 = vmatmul.mubr.bf16.gmra.mrb[0].mxu0 %v292
    %v400 = vpop.f32.mrb[0].mxu0
    %v401 = vadd.f32 %v316, %v400
    %v402 = vpop.f32.mrb[0].mxu0
    %v403 = vpop.f32.mrb[0].mxu0
    %v404 = vpop.f32.mrb[0].mxu0
    %405 = vdwg.mxu0
    %v406 = vmul.f32 %v401, %v401
    %v407 = vmul.f32 %v401, %v406
    %v408 = vmul.f32 %v407, 0.044715
    %v409 = vadd.f32 %v401, %v408
    %v410 = vmul.f32 %v409, 0.7978846
    %v411 = vtanh.pop %v410
    %v412 = vadd.f32 %v411, 1.0
    %v413 = vmul.f32 %v412, 0.5
    %v414 = vmul.f32 %v401, %v413
    %v415 = vadd.f32 %v291, %v414
    %v416 = vpack.c.bf16 %v415, %v415
    %s417 = scalar_lea.vmem [#allocation5], 128
    %v418 = vld [vmem:[%s417] sm:$0xf]
    %v419 = vld [vmem:[%s417 + $0x4] sm:$0xf]
    %v420 = vld [vmem:[%s417 + $0x8] sm:$0xf]
    %v421 = vld [vmem:[%s417 + $0xc] sm:$0xf]
    %v422 = vld [vmem:[%s417 + $0x10] sm:$0xf]
    %v423 = vld [vmem:[%s417 + $0x14] sm:$0xf]
    %v424 = vld [vmem:[%s417 + $0x18] sm:$0xf]
    %v425 = vld [vmem:[%s417 + $0x1c] sm:$0xf]
    %v426 = vld [vmem:[%s417 + $0x20] sm:$0xf]
    %v427 = vld [vmem:[%s417 + $0x24] sm:$0xf]
    %v428 = vld [vmem:[%s417 + $0x28] sm:$0xf]
    %v429 = vld [vmem:[%s417 + $0x2c] sm:$0xf]
    %v430 = vld [vmem:[%s417 + $0x30] sm:$0xf]
    %v431 = vld [vmem:[%s417 + $0x34] sm:$0xf]
    %v432 = vld [vmem:[%s417 + $0x38] sm:$0xf]
    %v433 = vld [vmem:[%s417 + $0x3c] sm:$0xf]
    %s434 = scalar_lea.vmem %s4, 2
    %v435 = vld [vmem:[%s434] sm:$0x1]
    %v437 = vlaneseq
    %v438 = vshrl.u32 %v437, 7
    %v439 = vsub.s32 0, %v438
    %v440 = vrot.slane %v435, %v439
    %v458 = vunpack.c.l.b16 %v418
    %v459 = vunpack.c.l.b16 %v419
    %v460 = vunpack.c.l.b16 %v420
    %v461 = vunpack.c.l.b16 %v421
    %v462 = vunpack.c.l.b16 %v422
    %v463 = vunpack.c.l.b16 %v423
    %v464 = vunpack.c.l.b16 %v424
    %v465 = vunpack.c.l.b16 %v425
    %v466 = vunpack.c.l.b16 %v426
    %v467 = vunpack.c.l.b16 %v427
    %v468 = vunpack.c.l.b16 %v428
    %v469 = vunpack.c.l.b16 %v429
    %v470 = vunpack.c.l.b16 %v430
    %v471 = vunpack.c.l.b16 %v431
    %v472 = vunpack.c.l.b16 %v432
    %v473 = vunpack.c.l.b16 %v433
    %v474 = vpack.c.b16 %v459, %v458
    %v475 = vpack.c.b16 %v461, %v460
    %v476 = vpack.c.b16 %v463, %v462
    %v477 = vpack.c.b16 %v465, %v464
    %v478 = vpack.c.b16 %v467, %v466
    %v479 = vpack.c.b16 %v469, %v468
    %v480 = vpack.c.b16 %v471, %v470
    %v481 = vpack.c.b16 %v473, %v472
    %490 = vmatprep.subr.bf16.mxu0 0
    %491 = vmatpush1.bf16.msra.mxu0 %v474
    %492 = vmatprep.subr.bf16.mxu0 0
    %493 = vmatpush1.bf16.msra.mxu0 %v475
    %494 = vmatprep.subr.bf16.mxu0 0
    %495 = vmatpush1.bf16.msra.mxu0 %v476
    %496 = vmatprep.subr.bf16.mxu0 0
    %497 = vmatpush1.bf16.msra.mxu0 %v477
    %498 = vmatprep.subr.bf16.mxu0 0
    %499 = vmatpush1.bf16.msra.mxu0 %v478
    %500 = vmatprep.subr.bf16.mxu0 0
    %501 = vmatpush1.bf16.msra.mxu0 %v479
    %502 = vmatprep.subr.bf16.mxu0 0
    %503 = vmatpush1.bf16.msra.mxu0 %v480
    %504 = vmatprep.subr.bf16.mxu0 0
    %505 = vmatpush1.bf16.msra.mxu0 %v481
    %506 = vmatprep.subr.bf16.mxu0 0
    %507 = vmatpush1.bf16.msra.mxu0 0
    %508 = vmatprep.subr.bf16.mxu0 0
    %509 = vmatpush1.bf16.msra.mxu0 0
    %510 = vmatprep.subr.bf16.mxu0 0
    %511 = vmatpush1.bf16.msra.mxu0 0
    %512 = vmatprep.subr.bf16.mxu0 0
    %513 = vmatpush1.bf16.msra.mxu0 0
    %514 = vmatprep.subr.bf16.mxu0 0
    %515 = vmatpush1.bf16.msra.mxu0 0
    %516 = vmatprep.subr.bf16.mxu0 0
    %517 = vmatpush1.bf16.msra.mxu0 0
    %518 = vmatprep.subr.bf16.mxu0 0
    %519 = vmatpush1.bf16.msra.mxu0 0
    %520 = vmatprep.subr.bf16.mxu0 0
    %521 = vmatpush1.bf16.msra.mxu0 0
    %522 = vmatprep.mubr.bf16.mxu0 0
    %523 = vmatmul.mubr.bf16.gmra.mrb[0].mxu0 %v416
    %v524 = vpop.f32.mrb[0].mxu0
    %v525 = vadd.f32 %v440, %v524
    %v526 = vpop.f32.mrb[0].mxu0
    %v527 = vpop.f32.mrb[0].mxu0
    %v528 = vpop.f32.mrb[0].mxu0
    %529 = vdwg.mxu0
    %v530 = vmul.f32 %v525, %v525
    %v531 = vmul.f32 %v525, %v530
    %v532 = vmul.f32 %v531, 0.044715
    %v533 = vadd.f32 %v525, %v532
    %v534 = vmul.f32 %v533, 0.7978846
    %v535 = vtanh.pop %v534
    %v536 = vadd.f32 %v535, 1.0
    %v537 = vmul.f32 %v536, 0.5
    %v538 = vmul.f32 %v525, %v537
    %v539 = vadd.f32 %v415, %v538
    %v540 = vpack.c.bf16 %v539, %v539
    %s541 = scalar_lea.vmem [#allocation5], 192
    %v542 = vld [vmem:[%s541] sm:$0xf]
    %v543 = vld [vmem:[%s541 + $0x4] sm:$0xf]
    %v544 = vld [vmem:[%s541 + $0x8] sm:$0xf]
    %v545 = vld [vmem:[%s541 + $0xc] sm:$0xf]
    %v546 = vld [vmem:[%s541 + $0x10] sm:$0xf]
    %v547 = vld [vmem:[%s541 + $0x14] sm:$0xf]
    %v548 = vld [vmem:[%s541 + $0x18] sm:$0xf]
    %v549 = vld [vmem:[%s541 + $0x1c] sm:$0xf]
    %v550 = vld [vmem:[%s541 + $0x20] sm:$0xf]
    %v551 = vld [vmem:[%s541 + $0x24] sm:$0xf]
    %v552 = vld [vmem:[%s541 + $0x28] sm:$0xf]
    %v553 = vld [vmem:[%s541 + $0x2c] sm:$0xf]
    %v554 = vld [vmem:[%s541 + $0x30] sm:$0xf]
    %v555 = vld [vmem:[%s541 + $0x34] sm:$0xf]
    %v556 = vld [vmem:[%s541 + $0x38] sm:$0xf]
    %v557 = vld [vmem:[%s541 + $0x3c] sm:$0xf]
    %s558 = scalar_lea.vmem %s4, 3
    %v559 = vld [vmem:[%s558] sm:$0x1]
    %v561 = vlaneseq
    %v562 = vshrl.u32 %v561, 7
    %v563 = vsub.s32 0, %v562
    %v564 = vrot.slane %v559, %v563
    %v582 = vunpack.c.l.b16 %v542
    %v583 = vunpack.c.l.b16 %v543
    %v584 = vunpack.c.l.b16 %v544
    %v585 = vunpack.c.l.b16 %v545
    %v586 = vunpack.c.l.b16 %v546
    %v587 = vunpack.c.l.b16 %v547
    %v588 = vunpack.c.l.b16 %v548
    %v589 = vunpack.c.l.b16 %v549
    %v590 = vunpack.c.l.b16 %v550
    %v591 = vunpack.c.l.b16 %v551
    %v592 = vunpack.c.l.b16 %v552
    %v593 = vunpack.c.l.b16 %v553
    %v594 = vunpack.c.l.b16 %v554
    %v595 = vunpack.c.l.b16 %v555
    %v596 = vunpack.c.l.b16 %v556
    %v597 = vunpack.c.l.b16 %v557
    %v598 = vpack.c.b16 %v583, %v582
    %v599 = vpack.c.b16 %v585, %v584
    %v600 = vpack.c.b16 %v587, %v586
    %v601 = vpack.c.b16 %v589, %v588
    %v602 = vpack.c.b16 %v591, %v590
    %v603 = vpack.c.b16 %v593, %v592
    %v604 = vpack.c.b16 %v595, %v594
    %v605 = vpack.c.b16 %v597, %v596
    %614 = vmatprep.subr.bf16.mxu0 0
    %615 = vmatpush1.bf16.msra.mxu0 %v598
    %616 = vmatprep.subr.bf16.mxu0 0
    %617 = vmatpush1.bf16.msra.mxu0 %v599
    %618 = vmatprep.subr.bf16.mxu0 0
    %619 = vmatpush1.bf16.msra.mxu0 %v600
    %620 = vmatprep.subr.bf16.mxu0 0
    %621 = vmatpush1.bf16.msra.mxu0 %v601
    %622 = vmatprep.subr.bf16.mxu0 0
    %623 = vmatpush1.bf16.msra.mxu0 %v602
    %624 = vmatprep.subr.bf16.mxu0 0
    %625 = vmatpush1.bf16.msra.mxu0 %v603
    %626 = vmatprep.subr.bf16.mxu0 0
    %627 = vmatpush1.bf16.msra.mxu0 %v604
    %628 = vmatprep.subr.bf16.mxu0 0
    %629 = vmatpush1.bf16.msra.mxu0 %v605
    %630 = vmatprep.subr.bf16.mxu0 0
    %631 = vmatpush1.bf16.msra.mxu0 0
    %632 = vmatprep.subr.bf16.mxu0 0
    %633 = vmatpush1.bf16.msra.mxu0 0
    %634 = vmatprep.subr.bf16.mxu0 0
    %635 = vmatpush1.bf16.msra.mxu0 0
    %636 = vmatprep.subr.bf16.mxu0 0
    %637 = vmatpush1.bf16.msra.mxu0 0
    %638 = vmatprep.subr.bf16.mxu0 0
    %639 = vmatpush1.bf16.msra.mxu0 0
    %640 = vmatprep.subr.bf16.mxu0 0
    %641 = vmatpush1.bf16.msra.mxu0 0
    %642 = vmatprep.subr.bf16.mxu0 0
    %643 = vmatpush1.bf16.msra.mxu0 0
    %644 = vmatprep.subr.bf16.mxu0 0
    %645 = vmatpush1.bf16.msra.mxu0 0
    %646 = vmatprep.mubr.bf16.mxu0 0
    %647 = vmatmul.mubr.bf16.gmra.mrb[0].mxu0 %v540
    %v648 = vpop.f32.mrb[0].mxu0
    %v649 = vadd.f32 %v564, %v648
    %v650 = vpop.f32.mrb[0].mxu0
    %v651 = vpop.f32.mrb[0].mxu0
    %v652 = vpop.f32.mrb[0].mxu0
    %653 = vdwg.mxu0
    %v654 = vmul.f32 %v649, %v649
    %v655 = vmul.f32 %v649, %v654
    %v656 = vmul.f32 %v655, 0.044715
    %v657 = vadd.f32 %v649, %v656
    %v658 = vmul.f32 %v657, 0.7978846
    %v659 = vtanh.pop %v658
    %v660 = vadd.f32 %v659, 1.0
    %v661 = vmul.f32 %v660, 0.5
    %v662 = vmul.f32 %v649, %v661
    %v663 = vadd.f32 %v539, %v662
    %v664 = vld [vmem:[%s5] sm:$0x1]
    %v666 = vlaneseq
    %v667 = vshrl.u32 %v666, 7
    %v668 = vsub.s32 0, %v667
    %v669 = vrot.slane %v664, %v668
    %v671 = vmul.f32 %v663, %v669
    %672 = vadd.xlane.f32.xlu0 %v671
    %v673 = vpop.xlane.xlu0 %672
    %v674 = vld [vmem:[#allocation2] sm:$0x1]
    %v676 = vlaneseq
    %v677 = vshrl.u32 %v676, 7
    %v678 = vsub.s32 0, %v677
    %v679 = vrot.slane %v674, %v678
    %v681 = vadd.f32 %v673, %v679
    %vm682 = vcmask 7168
    %683 = vst.msk [vmem:[%s7] sm:$0xff] %vm682, %v681
    // Predicated region
    $region38: #{_ember_fcn_forward_impl.1} parent=1 // pred_check
      _
    $region39: #{_ember_fcn_forward_impl.1} parent=1 // pred_check_branch
      %685 = sbr.rel (0) target = $region41
    $region40: #{_ember_fcn_forward_impl.1} parent=1 // pred_region
      _
    $region41: #{_ember_fcn_forward_impl.1} parent=1 // pred_fallthru
      _
    // Predicated region
    $region42: #{_ember_fcn_forward_impl.1} parent=1 // pred_check
      _
    $region43: #{_ember_fcn_forward_impl.1} parent=1 // pred_check_branch
      %687 = sbr.rel (0) target = $region45
    $region44: #{_ember_fcn_forward_impl.1} parent=1 // pred_region
      _
    $region45: #{_ember_fcn_forward_impl.1} parent=1 // pred_fallthru
      _
    %688 = vsyncpa [#allocation4], 1
    %689 = vsyncpa [#allocation6], 1

</llo_original>
